<compile_context>
chip_gen: v6e
topology: v6e:2x2x1
jax: 0.10.0
libtpu: 0.0.40
codegen_flags: <defaults>
</compile_context>

<pallas_src>
import math

import jax
import jax.numpy as jnp
from jax.experimental import pallas as pl
from jax.experimental.pallas import tpu as pltpu


def _identity1d_kernel(x_ref, w_ref, o_ref):
    # (TB, TF) * (1, TF) broadcast multiply; cast back to output dtype.
    o_ref[...] = (x_ref[...] * w_ref[...]).astype(o_ref.dtype)


def _round_up(v, m):
    return (v + m - 1) // m * m


def identity1d(x, weight, weight_mask, *, block_bytes=4 << 20,
               min_kernel_bytes=1 << 20, force_kernel=False):
    """x: (B, F); weight, weight_mask: (F,). Returns x * (weight_mask * weight)."""
    B, F = x.shape
    itemsize = jnp.dtype(x.dtype).itemsize

    # Fuse mask into weight once (tiny (F,) op), cast to x dtype so the kernel
    # multiply stays in input precision (output dtype = x.dtype).
    w = (weight_mask * weight).astype(x.dtype)

    # Fast path: tiny inputs are dominated by pallas_call launch + pipeline
    # warm-up; plain fused XLA multiply is already at HBM roofline there.
    if not force_kernel and B * F * itemsize < min_kernel_bytes:
        return x * w

    # Lane-dense packing for feature dims not a multiple of 128: fold the
    # smallest p batch rows into the lane axis so stores are full-width vst.
    pack = 1
    if F % 128 != 0 and F > 0 and B > 1:
        p0 = 128 // math.gcd(F, 128)   # minimal p with (p * F) % 128 == 0
        for k in range(1, 33):
            p = p0 * k
            if p > B or p * F * itemsize > block_bytes:
                break
            if p > 1 and B % p == 0:
                pack = p
                break

    if pack > 1:
        Bp, Fp = B // pack, F * pack
        xp = x.reshape(Bp, Fp)                    # pure row-major reshape
        wp = jnp.tile(w, (pack,)).reshape(1, Fp)  # weight repeated per folded row
    else:
        Bp, Fp = B, F
        xp = x
        wp = w.reshape(1, F)

    row_bytes = Fp * itemsize

    if row_bytes * min(Bp, 8) <= block_bytes:
        # --- Full-row feature tiles: 1-D grid over batch, contiguous DMAs. ---
        TF = Fp
        if Bp <= 8:
            TB = Bp                                   # full dim (always legal)
        else:
            TB = max(8, (block_bytes // row_bytes) // 8 * 8)
            # Keep >= 2 blocks along the parallel batch axis so both v7x
            # TensorCores engage (free on single-TC v5e/v6e).
            if Bp >= 16:
                TB = min(TB, _round_up((Bp + 1) // 2, 8))
            if TB >= Bp:
                TB = Bp
        grid = (pl.cdiv(Bp, TB),)
        in_specs = [
            pl.BlockSpec((TB, TF), lambda i: (i, 0)),
            pl.BlockSpec((1, TF), lambda i: (0, 0)),   # resident weight block
        ]
        out_specs = pl.BlockSpec((TB, TF), lambda i: (i, 0))
        dim_sem = ("parallel",)
    else:
        # --- Very wide feature dim: split the feature axis too (rare). ---
        TB = Bp if Bp <= 8 else 8
        TF = max(128, (block_bytes // (TB * itemsize)) // 128 * 128)
        if TF >= Fp:
            TF = Fp
        grid = (pl.cdiv(Bp, TB), pl.cdiv(Fp, TF))
        in_specs = [
            pl.BlockSpec((TB, TF), lambda i, j: (i, j)),
            pl.BlockSpec((1, TF), lambda i, j: (0, j)),
        ]
        out_specs = pl.BlockSpec((TB, TF), lambda i, j: (i, j))
        dim_sem = ("parallel", "parallel")

    cost = pl.CostEstimate(
        flops=Bp * Fp,
        transcendentals=0,
        bytes_accessed=2 * Bp * Fp * itemsize + Fp * itemsize,
    )

    out = pl.pallas_call(
        _identity1d_kernel,
        out_shape=jax.ShapeDtypeStruct((Bp, Fp), x.dtype),
        grid=grid,
        in_specs=in_specs,
        out_specs=out_specs,
        compiler_params=pltpu.CompilerParams(
            dimension_semantics=dim_sem,
            vmem_limit_bytes=48 << 20,   # safe under v7x's 64 MiB VMEM
        ),
        cost_estimate=cost,
    )(xp, wp)

    if pack > 1:
        out = out.reshape(B, F)
    return out


if __name__ == "__main__":
    key = jax.random.PRNGKey(0)

    # Module-sized small example: batch=8, num_features=32.
    batch, num_features = 8, 32
    x = jax.random.normal(key, (batch, num_features), dtype=jnp.float32)
    weight = jnp.ones((num_features,), dtype=jnp.float32)       # reset_parameters: ones
    weight_mask = jnp.ones((num_features,), dtype=jnp.float32)  # buffer of ones
    ref = x * (weight_mask * weight)

    # (a) default path: tiny input -> plain-JAX fast path.
    out_fast = jax.block_until_ready(identity1d(x, weight, weight_mask))
    assert out_fast.shape == x.shape and out_fast.dtype == x.dtype
    assert jnp.allclose(out_fast, ref), "mismatch (fast path)"

    # (b) force the Pallas kernel on the same shape (lane-packing: 8x32 -> 2x128).
    out_k = jax.block_until_ready(identity1d(x, weight, weight_mask, force_kernel=True))
    assert jnp.allclose(out_k, ref), "mismatch (packed kernel path)"

    # (c) aligned shape, multi-block 1-D grid (full-row tiles, >=2 batch blocks).
    B2, F2 = 64, 256
    x2 = jax.random.normal(jax.random.PRNGKey(1), (B2, F2), dtype=jnp.float32)
    w2 = jax.random.normal(jax.random.PRNGKey(2), (F2,), dtype=jnp.float32)
    m2 = jnp.ones((F2,), dtype=jnp.float32)
    out2 = jax.block_until_ready(identity1d(x2, w2, m2, force_kernel=True))
    assert jnp.allclose(out2, x2 * (m2 * w2), atol=1e-6), "mismatch (full-row tiled case)"

    # (d) non-128-multiple feature width handled by the general pack search (F=160 -> p=4).
    B3, F3 = 16, 160
    x3 = jax.random.normal(jax.random.PRNGKey(3), (B3, F3), dtype=jnp.float32)
    w3 = jax.random.normal(jax.random.PRNGKey(4), (F3,), dtype=jnp.float32)
    m3 = jnp.ones((F3,), dtype=jnp.float32)
    out3 = jax.block_until_ready(identity1d(x3, w3, m3, force_kernel=True))
    assert jnp.allclose(out3, x3 * (m3 * w3), atol=1e-6), "mismatch (general pack case)"

    print("KERNEL_OK")
</pallas_src>

<mosaic_0001>
module attributes {stable_mosaic.version = 11 : i64} {
  func.func @_identity1d_kernel(%arg0: i32, %arg1: memref<2x128xf32, #tpu.memory_space<vmem>>, %arg2: memref<1x128xf32, #tpu.memory_space<vmem>>, %arg3: memref<2x128xf32, #tpu.memory_space<vmem>>) attributes {dimension_semantics = [#tpu.dimension_semantics<parallel>], iteration_bounds = array<i64: 1>, scalar_prefetch = 0 : i64, scratch_operands = 0 : i64, tpu.core_type = #tpu.core_type<tc>, window_params = [{transform_indices = @transform_0, window_bounds = array<i64: 2, 128>}, {pipeline_mode = #tpu.pipeline_mode<synchronous>, transform_indices = @transform_1, window_bounds = array<i64: 1, 128>}, {transform_indices = @transform_2, window_bounds = array<i64: 2, 128>}]} {
    %c0 = arith.constant 0 : index
    %c0_0 = arith.constant 0 : index
    %0 = vector.load %arg1[%c0, %c0_0] : memref<2x128xf32, #tpu.memory_space<vmem>>, vector<2x128xf32>
    %c0_1 = arith.constant 0 : index
    %c0_2 = arith.constant 0 : index
    %1 = vector.load %arg2[%c0_1, %c0_2] : memref<1x128xf32, #tpu.memory_space<vmem>>, vector<1x128xf32>
    %2 = vector.broadcast %1 : vector<1x128xf32> to vector<2x128xf32>
    %3 = arith.mulf %0, %2 : vector<2x128xf32>
    %c0_3 = arith.constant 0 : index
    %c0_4 = arith.constant 0 : index
    %4 = vector.load %arg3[%c0_3, %c0_4] : memref<2x128xf32, #tpu.memory_space<vmem>>, vector<2x128xf32>
    tpu.vector_store %arg3[%c0_3, %c0_4], %3 {strides = array<i32>} : memref<2x128xf32, #tpu.memory_space<vmem>>, vector<2x128xf32>,
    return
  }
  func.func @transform_0(%arg0: i32) -> (i32, i32) {
    %c0_i32 = arith.constant 0 : i32
    %c0_i32_0 = arith.constant 0 : i32
    return %arg0, %c0_i32 : i32, i32
  }
  func.func @transform_1(%arg0: i32) -> (i32, i32) {
    %c0_i32 = arith.constant 0 : i32
    %c0_i32_0 = arith.constant 0 : i32
    %c0_i32_1 = arith.constant 0 : i32
    return %c0_i32, %c0_i32_0 : i32, i32
  }
  func.func @transform_2(%arg0: i32) -> (i32, i32) {
    %c0_i32 = arith.constant 0 : i32
    %c0_i32_0 = arith.constant 0 : i32
    return %arg0, %c0_i32 : i32, i32
  }
}

</mosaic_0001>

<llo_original>
// kernel: tpu_custom_call.1
$region0: #{tpu_custom_call.1}
  #allocation0 [shape = 'u32[]', space=smem, size = 0x4, offset = 0x4, fixed_abs, tag = 'smem constant byte address 0x4 - core index']
  #allocation1 [shape = 'u32[144,128]{1,0:T(1,128)}', space=vmem, size = 0x12000, scoped, tag = 'internal scratch']
  %s0 = inlined_call_operand.hbm [shape: f32[2,128], index: 0, kind: input, shape index: {}]
  %s1 = inlined_call_operand.vmem [shape: f32[1,128], index: 1, kind: input, shape index: {}]
  %s2 = inlined_call_operand.hbm [shape: f32[2,128], index: 2, kind: output, shape index: {}]
  %s3 = sld [smem:[#allocation0]]
  $region22: #{tpu_custom_call.1} parent=0
    _
  %s5 = ssub.s32 1, %s3
  %s6 = scalar_select 0, %s5, %s3
  $region1: #{tpu_custom_call.1} parent=0
    #allocation2 [shape = 'u8[1024]{0}', space=vmem, size = 0x400, scoped, tag = 'input window, operand 0, single buffered']
    #allocation3 [shape = 's32[1]{0}', space=sflag, size = 0x4, scoped, tag = 'scoped memory for tpu_custom_call.1']
    #allocation4 [shape = 's32[1]{0}', space=sflag, size = 0x4, scoped, tag = 'scoped memory for tpu_custom_call.1']
    #allocation5 [shape = 'u8[1024]{0}', space=vmem, size = 0x400, scoped, tag = 'output window, operand 0, single buffered']
    %7 = vsyncpa [#allocation3], 0
    %8 = vsyncpa [#allocation4], 0
    // Predicated region
    $region2: #{tpu_custom_call.1} parent=1 // pred_check
      _
    $region3: #{tpu_custom_call.1} parent=1 // pred_check_branch
      %10 = sbr.rel (0) target = $region5
    $region4: #{tpu_custom_call.1} parent=1 // pred_region
      %s12 = ssub.s32 32, 32
      %13 = vsyncadd [#allocation3], %s12
      %s15 = sshll.u32 [#allocation2], 4
      %s16 = int_to_ptr.vmem [resolvable:$true] %s15
      %18 = dma.hbm_to_vmem [thread:$0]  %s0, 32, %s16, [#allocation3]
    $region5: #{tpu_custom_call.1} parent=1 // pred_fallthru
      _
    // Predicated region
    $region6: #{tpu_custom_call.1} parent=1 // pred_check
      _
    $region7: #{tpu_custom_call.1} parent=1 // pred_check_branch
      %20 = sbr.rel (0) target = $region9
    $region8: #{tpu_custom_call.1} parent=1 // pred_region
      _
    $region9: #{tpu_custom_call.1} parent=1 // pred_fallthru
      _
    // Predicated region
    $region10: #{tpu_custom_call.1} parent=1 // pred_check
      _
    $region11: #{tpu_custom_call.1} parent=1 // pred_check_branch
      %22 = sbr.rel (0) target = $region13
    $region12: #{tpu_custom_call.1} parent=1 // pred_region
      %23 = dma.done [#allocation3], 32
    $region13: #{tpu_custom_call.1} parent=1 // pred_fallthru
      _
    %v24 = vld [vmem:[#allocation2] sm:$0x3]
    %v25 = vld [vmem:[%s1] sm:$0x1]
    %v27 = vlaneseq
    %v28 = vshrl.u32 %v27, 7
    %v29 = vsub.s32 0, %v28
    %v30 = vrot.slane %v25, %v29
    %v32 = vmul.f32 %v24, %v30
    %33 = vst [vmem:[#allocation5] sm:$0x3] %v32
    // Predicated region
    $region14: #{tpu_custom_call.1} parent=1 // pred_check
      _
    $region15: #{tpu_custom_call.1} parent=1 // pred_check_branch
      %35 = sbr.rel (0) target = $region17
    $region16: #{tpu_custom_call.1} parent=1 // pred_region
      %s37 = ssub.s32 32, 32
      %38 = vsyncadd [#allocation4], %s37
      %s40 = sshll.u32 [#allocation5], 4
      %s41 = int_to_ptr.vmem [resolvable:$true] %s40
      %43 = dma.vmem_to_hbm [thread:$0]  %s41, 32, %s2, [#allocation4]
    $region17: #{tpu_custom_call.1} parent=1 // pred_fallthru
      _
    // Predicated region
    $region18: #{tpu_custom_call.1} parent=1 // pred_check
      _
    $region19: #{tpu_custom_call.1} parent=1 // pred_check_branch
      %45 = sbr.rel (0) target = $region21
    $region20: #{tpu_custom_call.1} parent=1 // pred_region
      %46 = dma.done [#allocation4], 32
    $region21: #{tpu_custom_call.1} parent=1 // pred_fallthru
      _
    %47 = vsyncpa [#allocation3], 1
    %48 = vsyncpa [#allocation4], 1

</llo_original>
